<compile_context>
chip_gen: v7x
topology: tpu7x:2x2x1
jax: 0.10.0
libtpu: 0.0.40
codegen_flags: <defaults>
</compile_context>

<pallas_src>
import functools

import jax
import jax.numpy as jnp
from jax.experimental import pallas as pl
from jax.experimental.pallas import tpu as pltpu

# Effectively -inf for masked logits; exp(_NEG_BIG - m) underflows cleanly to 0.
_NEG_BIG = -1.0e30


def _supcon_kernel(gid_row_ref, gid_col_ref, idx_row_ref, idx_col_ref,
                   npos_ref, anchor_ref, contrast_ref, out_ref,
                   a_scaled, m_run, l_run, s_pos, *,
                   inv_temp, loss_scale, fixed_max):
    j = pl.program_id(1)              # contrast (column) tile -- LSE reduction
    last_j = pl.num_programs(1) - 1

    @pl.when(j == 0)
    def _init():
        # 1/temperature hoisted out of the column loop: rescale the resident
        # anchor tile once per row tile (saves blk*D VPU multiplies per j, and
        # on v5e a bf16 unpack/mul/pack per column tile).
        a_scaled[...] = anchor_ref[...] * jnp.asarray(inv_temp,
                                                      dtype=anchor_ref.dtype)
        if fixed_max is None:
            m_run[...] = jnp.full_like(m_run, -jnp.inf)
        l_run[...] = jnp.zeros_like(l_run)
        s_pos[...] = jnp.zeros_like(s_pos)

    a = a_scaled[...]                 # (blk, D), input dtype, carries 1/T
    c = contrast_ref[...]             # (blk, D), input dtype
    # A . C^T without an explicit transpose: contract dim 1 of both operands.
    # HIGHEST only for f32 inputs (exact-reference match); bf16 inputs use the
    # native bf16 MXU path with f32 accumulation (preferred on v6e/v7x at
    # large D instead of f32 + HIGHEST multi-pass emulation).
    precision = (jax.lax.Precision.HIGHEST if a.dtype == jnp.float32
                 else jax.lax.Precision.DEFAULT)
    s = jax.lax.dot_general(a, c, (((1,), (1,)), ((), ())),
                            preferred_element_type=jnp.float32,
                            precision=precision)            # (blk, blk) f32

    # Diagonal (self-contrast) exclusion and positive-pair mask, both as
    # boolean broadcasts of already-resident (blk,1)/(1,blk) int32 tiles.
    # Masking the diagonal BEFORE the exp/sum is numerically exact (no
    # subtract-back cancellation) and adds only cheap VPU selects.
    not_diag = idx_row_ref[...] != idx_col_ref[...]          # (blk, blk) bool
    pos = jnp.logical_and(gid_row_ref[...] == gid_col_ref[...], not_diag)
    s_lse = jnp.where(not_diag, s, _NEG_BIG)

    if fixed_max is None:
        # Online log-sum-exp over column tiles.
        m_old = m_run[...]
        m_new = jnp.maximum(m_old, jnp.max(s_lse, axis=1, keepdims=True))
        p = jnp.exp(s_lse - m_new)
        alpha = jnp.exp(m_old - m_new)
        l_run[...] = l_run[...] * alpha + jnp.sum(p, axis=1, keepdims=True)
        m_run[...] = m_new
    else:
        # Normalized-feature fast path: logits <= 1/T, so a constant shift is
        # safe; no running max, no row-max reduction, no alpha rescale.
        p = jnp.exp(s_lse - fixed_max)
        l_run[...] = l_run[...] + jnp.sum(p, axis=1, keepdims=True)

    # sum over positive pairs of the (scaled) logits; pos already excludes the
    # diagonal, and n_pos is precomputed in the wrapper.
    s_pos[...] = s_pos[...] + jnp.sum(jnp.where(pos, s, 0.0), axis=1,
                                      keepdims=True)

    @pl.when(j == last_j)
    def _finalize():
        # sum_j mask*log_prob = sum_j mask*logits - n_pos * log Z_row,
        # so log_prob is never materialized.
        shift = m_run[...] if fixed_max is None else fixed_max
        log_z = shift + jnp.log(l_run[...])
        npos = npos_ref[...]
        # TODO(synk): rows with zero positives are clamped to 0 loss here; the
        # PyTorch original divides by 0 and NaN-poisons the mean.
        mean_log_prob_pos = jnp.where(
            npos > 0.0,
            (s_pos[...] - npos * log_z) / jnp.maximum(npos, 1.0),
            0.0)
        out_ref[...] = (-loss_scale) * mean_log_prob_pos


def _pick_block(n, target=256, align=128):
    """Largest tile <= target that divides n and is a multiple of `align`
    (TPU lane constraint), capped at n//2 once n >= 2*align so the parallel
    row-tile axis spans both TensorCores on v7x.  Falls back to n (single
    tile) for small / non-aligned n.  For very large N, passing block_size=512
    amortizes per-grid-step overhead further (budget ~3*blk^2*4B of f32
    intermediates + the (blk,D) feature tiles against the chip's VMEM)."""
    if n <= align:
        return n
    limit = min(target, n)
    if n >= 2 * align:
        limit = min(limit, n // 2)
    t = (limit // align) * align
    while t >= align:
        if n % t == 0:
            return t
        t -= align
    return n


def supcon_loss(features, labels=None, mask=None, *, temperature=0.07,
                contrast_mode="all", base_temperature=0.07, block_size=None,
                assume_normalized=False):
    """SupCon / SimCLR loss. features: [bsz, n_views, ...] -> scalar float32.

    assume_normalized=True enables a faster fixed-shift LSE path that is only
    valid when features are L2-normalized along the last dim.
    """
    if features.ndim < 3:
        raise ValueError("`features` needs to be [bsz, n_views, ...]")
    bsz, n_views = features.shape[0], features.shape[1]
    feats = features.reshape(bsz, n_views, -1)   # keep input dtype (bf16 ok)
    d = feats.shape[-1]

    if labels is not None and mask is not None:
        raise ValueError("Cannot define both `labels` and `mask`")
    if mask is not None:
        # TODO(synk): explicit `mask=` path (arbitrary [bsz,bsz] mask) is not
        # wired into the tiled kernel; only labels / SimCLR are implemented.
        raise NotImplementedError("explicit `mask=` not implemented")
    if labels is None:
        group = jnp.arange(bsz, dtype=jnp.int32)          # SimCLR: eye(bsz)
        counts = jnp.ones((bsz,), jnp.float32)
    else:
        labels = jnp.asarray(labels).reshape(-1)
        if labels.shape[0] != bsz:
            raise ValueError("Num of labels does not match num of features")
        group = labels.astype(jnp.int32)
        # O(bsz^2) one-time host-side count of same-label samples (incl. self).
        counts = jnp.sum((group[:, None] == group[None, :]).astype(jnp.float32),
                         axis=1)

    if contrast_mode == "one":
        # TODO(synk): contrast_mode='one' (anchor = view 0 only) not implemented.
        raise NotImplementedError("contrast_mode='one' not implemented")
    if contrast_mode != "all":
        raise ValueError(f"Unknown mode: {contrast_mode}")

    n = bsz * n_views
    # contrast_feature == torch.cat(torch.unbind(features, dim=1), dim=0)
    contrast_feature = jnp.swapaxes(feats, 0, 1).reshape(n, d)
    group_ids = jnp.tile(group, n_views)                  # view-major, length n
    row_idx = jnp.arange(n, dtype=jnp.int32)              # global row/col index
    # Precomputed positives-per-anchor (diagonal already excluded).
    npos = jnp.tile(n_views * counts - 1.0, n_views).astype(jnp.float32)

    blk = _pick_block(n) if block_size is None else block_size
    if n % blk != 0 or not (blk == n or blk % 128 == 0):
        raise ValueError(f"invalid block_size {blk} for N={n}")
    grid = (n // blk, n // blk)

    inv_temp = 1.0 / temperature
    kernel = functools.partial(
        _supcon_kernel,
        inv_temp=inv_temp,
        loss_scale=temperature / base_temperature,
        fixed_max=(inv_temp if assume_normalized else None))

    row_vec_spec = pl.BlockSpec((blk, 1), lambda i, j: (i, 0))
    col_vec_spec = pl.BlockSpec((1, blk), lambda i, j: (0, j))

    per_row_loss = pl.pallas_call(
        kernel,
        out_shape=jax.ShapeDtypeStruct((n, 1), jnp.float32),
        grid_spec=pltpu.PrefetchScalarGridSpec(
            num_scalar_prefetch=0,
            grid=grid,
            in_specs=[
                row_vec_spec,                                  # row group ids
                col_vec_spec,                                  # col group ids
                row_vec_spec,                                  # row global idx
                col_vec_spec,                                  # col global idx
                row_vec_spec,                                  # n_pos per row
                pl.BlockSpec((blk, d), lambda i, j: (i, 0)),   # anchor (resident)
                pl.BlockSpec((blk, d), lambda i, j: (j, 0)),   # contrast (streams)
            ],
            out_specs=pl.BlockSpec((blk, 1), lambda i, j: (i, 0)),
            scratch_shapes=[
                pltpu.VMEM((blk, d), feats.dtype),    # 1/T-scaled anchor tile
                pltpu.VMEM((blk, 1), jnp.float32),    # running row max
                pltpu.VMEM((blk, 1), jnp.float32),    # running sum-exp
                pltpu.VMEM((blk, 1), jnp.float32),    # running sum(pos*logits)
            ],
        ),
        compiler_params=pltpu.CompilerParams(
            # row tiles are independent -> megacore-parallel; the column axis
            # carries the online-LSE accumulators -> arbitrary (sequential).
            dimension_semantics=("parallel", "arbitrary"),
            vmem_limit_bytes=32 * 1024 * 1024,
        ),
    )(group_ids.reshape(n, 1), group_ids.reshape(1, n),
      row_idx.reshape(n, 1), row_idx.reshape(1, n),
      npos.reshape(n, 1),
      contrast_feature, contrast_feature)

    # loss.view(anchor_count, bsz).mean() == mean over all N anchor rows.
    return jnp.mean(per_row_loss)


def _supcon_loss_ref(features, labels, *, temperature=0.07, base_temperature=0.07):
    """Pure-JAX reference mirroring the PyTorch code (contrast_mode='all')."""
    bsz, n_views = features.shape[0], features.shape[1]
    feats = features.reshape(bsz, n_views, -1).astype(jnp.float32)
    labels = jnp.asarray(labels).reshape(-1, 1)
    mask = (labels == labels.T).astype(jnp.float32)
    contrast_feature = jnp.concatenate(
        [feats[:, v, :] for v in range(n_views)], axis=0)
    n = bsz * n_views
    logits = jnp.matmul(contrast_feature, contrast_feature.T,
                        precision=jax.lax.Precision.HIGHEST) / temperature
    logits = logits - jnp.max(logits, axis=1, keepdims=True)
    mask = jnp.tile(mask, (n_views, n_views))
    logits_mask = 1.0 - jnp.eye(n, dtype=jnp.float32)
    mask = mask * logits_mask
    exp_logits = jnp.exp(logits) * logits_mask
    log_prob = logits - jnp.log(exp_logits.sum(1, keepdims=True))
    mean_log_prob_pos = (mask * log_prob).sum(1) / mask.sum(1)
    loss = -(temperature / base_temperature) * mean_log_prob_pos
    return loss.reshape(n_views, bsz).mean()


if __name__ == "__main__":
    key = jax.random.PRNGKey(0)
    k1, k2, k3, k4 = jax.random.split(key, 4)

    # Case 1: small shapes, single-tile grid (bsz=8, n_views=2, D=32 -> N=16).
    bsz, n_views, feat_dim = 8, 2, 32
    f1 = jax.random.normal(k1, (bsz, n_views, feat_dim), dtype=jnp.float32)
    f1 = f1 / jnp.linalg.norm(f1, axis=-1, keepdims=True)
    l1 = jax.random.randint(k2, (bsz,), 0, 4)

    out1 = jax.block_until_ready(supcon_loss(f1, labels=l1))
    ref1 = _supcon_loss_ref(f1, l1)
    assert jnp.allclose(out1, ref1, rtol=1e-4, atol=1e-4), (out1, ref1)

    # SimCLR (no labels / no mask) path on the same features.
    out1u = jax.block_until_ready(supcon_loss(f1))
    ref1u = _supcon_loss_ref(f1, jnp.arange(bsz))
    assert jnp.allclose(out1u, ref1u, rtol=1e-4, atol=1e-4), (out1u, ref1u)

    # Fixed-shift LSE fast path (valid: f1 is L2-normalized).
    out1n = jax.block_until_ready(
        supcon_loss(f1, labels=l1, assume_normalized=True))
    assert jnp.allclose(out1n, ref1, rtol=1e-4, atol=1e-4), (out1n, ref1)

    # Case 2: multi-tile grid (bsz=128, n_views=2 -> N=256, blk=128 -> 2x2 grid,
    # so both v7x TensorCores get a row tile).
    bsz2 = 128
    f2 = jax.random.normal(k3, (bsz2, n_views, feat_dim), dtype=jnp.float32)
    f2 = f2 / jnp.linalg.norm(f2, axis=-1, keepdims=True)
    l2 = jax.random.randint(k4, (bsz2,), 0, 16)

    out2 = jax.block_until_ready(supcon_loss(f2, labels=l2))
    ref2 = _supcon_loss_ref(f2, l2)
    assert jnp.allclose(out2, ref2, rtol=1e-4, atol=1e-4), (out2, ref2)

    out2n = jax.block_until_ready(
        supcon_loss(f2, labels=l2, assume_normalized=True, block_size=128))
    assert jnp.allclose(out2n, ref2, rtol=1e-4, atol=1e-4), (out2n, ref2)

    # bf16 features (native bf16 MXU path, f32 accumulation) — loose tolerance.
    out2_bf16 = jax.block_until_ready(
        supcon_loss(f2.astype(jnp.bfloat16), labels=l2, block_size=128))
    assert jnp.allclose(out2_bf16, ref2, rtol=5e-2, atol=5e-2), (out2_bf16, ref2)

    print("KERNEL_OK")
</pallas_src>

<mosaic_0001>
module attributes {stable_mosaic.version = 11 : i64} {
  func.func @_supcon_kernel(%arg0: i32, %arg1: i32, %arg2: memref<16x1xi32, #tpu.memory_space<vmem>>, %arg3: memref<1x16xi32, #tpu.memory_space<vmem>>, %arg4: memref<16x1xi32, #tpu.memory_space<vmem>>, %arg5: memref<1x16xi32, #tpu.memory_space<vmem>>, %arg6: memref<16x1xf32, #tpu.memory_space<vmem>>, %arg7: memref<16x32xf32, #tpu.memory_space<vmem>>, %arg8: memref<16x32xf32, #tpu.memory_space<vmem>>, %arg9: memref<16x1xf32, #tpu.memory_space<vmem>>, %arg10: memref<16x32xf32, #tpu.memory_space<vmem>>, %arg11: memref<16x1xf32, #tpu.memory_space<vmem>>, %arg12: memref<16x1xf32, #tpu.memory_space<vmem>>, %arg13: memref<16x1xf32, #tpu.memory_space<vmem>>) attributes {dimension_semantics = [#tpu.dimension_semantics<parallel>, #tpu.dimension_semantics<arbitrary>], iteration_bounds = array<i64: 1, 1>, scalar_prefetch = 0 : i64, scratch_operands = 4 : i64, tpu.core_type = #tpu.core_type<tc>, window_params = [{transform_indices = @transform_0, window_bounds = array<i64: 16, 1>}, {transform_indices = @transform_1, window_bounds = array<i64: 1, 16>}, {transform_indices = @transform_2, window_bounds = array<i64: 16, 1>}, {transform_indices = @transform_3, window_bounds = array<i64: 1, 16>}, {transform_indices = @transform_4, window_bounds = array<i64: 16, 1>}, {transform_indices = @transform_5, window_bounds = array<i64: 16, 32>}, {transform_indices = @transform_6, window_bounds = array<i64: 16, 32>}, {transform_indices = @transform_7, window_bounds = array<i64: 16, 1>}]} {
    %c0_i32 = arith.constant 0 : i32
    %0 = arith.cmpi eq, %arg1, %c0_i32 : i32
    %1 = arith.extui %0 : i1 to i32
    %c0_i32_0 = arith.constant 0 : i32
    %2 = arith.cmpi ne, %1, %c0_i32_0 : i32
    scf.if %2 {
      %c0_31 = arith.constant 0 : index
      %c0_32 = arith.constant 0 : index
      %45 = vector.load %arg7[%c0_31, %c0_32] : memref<16x32xf32, #tpu.memory_space<vmem>>, vector<16x32xf32>
      %cst_33 = arith.constant 14.2857141 : f32
      %46 = vector.broadcast %cst_33 : f32 to vector<16x32xf32>
      %47 = arith.mulf %45, %46 : vector<16x32xf32>
      %c0_34 = arith.constant 0 : index
      %c0_35 = arith.constant 0 : index
      %48 = vector.load %arg10[%c0_34, %c0_35] : memref<16x32xf32, #tpu.memory_space<vmem>>, vector<16x32xf32>
      tpu.vector_store %arg10[%c0_34, %c0_35], %47 {strides = array<i32>} : memref<16x32xf32, #tpu.memory_space<vmem>>, vector<16x32xf32>,
      %cst_36 = arith.constant 0xFF800000 : f32
      %49 = vector.broadcast %cst_36 : f32 to vector<16x1xf32>
      %c0_37 = arith.constant 0 : index
      %c0_38 = arith.constant 0 : index
      %50 = vector.load %arg11[%c0_37, %c0_38] : memref<16x1xf32, #tpu.memory_space<vmem>>, vector<16x1xf32>
      tpu.vector_store %arg11[%c0_37, %c0_38], %49 {strides = array<i32>} : memref<16x1xf32, #tpu.memory_space<vmem>>, vector<16x1xf32>,
      %cst_39 = arith.constant 0.000000e+00 : f32
      %51 = vector.broadcast %cst_39 : f32 to vector<16x1xf32>
      %c0_40 = arith.constant 0 : index
      %c0_41 = arith.constant 0 : index
      %52 = vector.load %arg12[%c0_40, %c0_41] : memref<16x1xf32, #tpu.memory_space<vmem>>, vector<16x1xf32>
      tpu.vector_store %arg12[%c0_40, %c0_41], %51 {strides = array<i32>} : memref<16x1xf32, #tpu.memory_space<vmem>>, vector<16x1xf32>,
      %cst_42 = arith.constant 0.000000e+00 : f32
      %53 = vector.broadcast %cst_42 : f32 to vector<16x1xf32>
      %c0_43 = arith.constant 0 : index
      %c0_44 = arith.constant 0 : index
      %54 = vector.load %arg13[%c0_43, %c0_44] : memref<16x1xf32, #tpu.memory_space<vmem>>, vector<16x1xf32>
      tpu.vector_store %arg13[%c0_43, %c0_44], %53 {strides = array<i32>} : memref<16x1xf32, #tpu.memory_space<vmem>>, vector<16x1xf32>,
    } else {
    }
    %c0 = arith.constant 0 : index
    %c0_1 = arith.constant 0 : index
    %3 = vector.load %arg10[%c0, %c0_1] : memref<16x32xf32, #tpu.memory_space<vmem>>, vector<16x32xf32>
    %c0_2 = arith.constant 0 : index
    %c0_3 = arith.constant 0 : index
    %4 = vector.load %arg8[%c0_2, %c0_3] : memref<16x32xf32, #tpu.memory_space<vmem>>, vector<16x32xf32>
    %cst = arith.constant dense<0.000000e+00> : vector<16x16xf32>
    %5 = tpu.matmul %3, %4, %cst {dimension_numbers = #tpu.dot_dimension_numbers<[1], [1], [0], [0], [0, 0, 1, 0], [], []>, precision = #tpu.contract_precision<fp32>} : vector<16x32xf32>, vector<16x32xf32>, vector<16x16xf32> -> vector<16x16xf32>
    %c0_4 = arith.constant 0 : index
    %c0_5 = arith.constant 0 : index
    %6 = vector.load %arg4[%c0_4, %c0_5] : memref<16x1xi32, #tpu.memory_space<vmem>>, vector<16x1xi32>
    %c0_6 = arith.constant 0 : index
    %c0_7 = arith.constant 0 : index
    %7 = vector.load %arg5[%c0_6, %c0_7] : memref<1x16xi32, #tpu.memory_space<vmem>>, vector<1x16xi32>
    %8 = vector.broadcast %6 : vector<16x1xi32> to vector<16x16xi32>
    %9 = vector.broadcast %7 : vector<1x16xi32> to vector<16x16xi32>
    %10 = arith.cmpi ne, %8, %9 : vector<16x16xi32>
    %c0_8 = arith.constant 0 : index
    %c0_9 = arith.constant 0 : index
    %11 = vector.load %arg2[%c0_8, %c0_9] : memref<16x1xi32, #tpu.memory_space<vmem>>, vector<16x1xi32>
    %c0_10 = arith.constant 0 : index
    %c0_11 = arith.constant 0 : index
    %12 = vector.load %arg3[%c0_10, %c0_11] : memref<1x16xi32, #tpu.memory_space<vmem>>, vector<1x16xi32>
    %13 = vector.broadcast %11 : vector<16x1xi32> to vector<16x16xi32>
    %14 = vector.broadcast %12 : vector<1x16xi32> to vector<16x16xi32>
    %15 = arith.cmpi eq, %13, %14 : vector<16x16xi32>
    %16 = arith.andi %15, %10 : vector<16x16xi1>
    %cst_12 = arith.constant -1.000000e+30 : f32
    %17 = vector.broadcast %cst_12 : f32 to vector<16x16xf32>
    %18 = arith.select %10, %5, %17 : vector<16x16xi1>, vector<16x16xf32>
    %c0_13 = arith.constant 0 : index
    %c0_14 = arith.constant 0 : index
    %19 = vector.load %arg11[%c0_13, %c0_14] : memref<16x1xf32, #tpu.memory_space<vmem>>, vector<16x1xf32>
    %cst_15 = arith.constant dense<0xFF800000> : vector<16xf32>
    %20 = vector.multi_reduction <maximumf>, %18, %cst_15 [1] : vector<16x16xf32> to vector<16xf32>
    %21 = vector.shape_cast %20 : vector<16xf32> to vector<16x1xf32>
    %22 = arith.maximumf %19, %21 : vector<16x1xf32>
    %23 = vector.broadcast %22 : vector<16x1xf32> to vector<16x16xf32>
    %24 = arith.subf %18, %23 : vector<16x16xf32>
    %25 = math.exp %24 : vector<16x16xf32>
    %26 = arith.subf %19, %22 : vector<16x1xf32>
    %27 = math.exp %26 : vector<16x1xf32>
    %c0_16 = arith.constant 0 : index
    %c0_17 = arith.constant 0 : index
    %28 = vector.load %arg12[%c0_16, %c0_17] : memref<16x1xf32, #tpu.memory_space<vmem>>, vector<16x1xf32>
    %29 = arith.mulf %28, %27 : vector<16x1xf32>
    %cst_18 = arith.constant dense<0.000000e+00> : vector<16xf32>
    %30 = vector.multi_reduction <add>, %25, %cst_18 [1] : vector<16x16xf32> to vector<16xf32>
    %31 = vector.shape_cast %30 : vector<16xf32> to vector<16x1xf32>
    %32 = arith.addf %29, %31 : vector<16x1xf32>
    %c0_19 = arith.constant 0 : index
    %c0_20 = arith.constant 0 : index
    %33 = vector.load %arg12[%c0_19, %c0_20] : memref<16x1xf32, #tpu.memory_space<vmem>>, vector<16x1xf32>
    tpu.vector_store %arg12[%c0_19, %c0_20], %32 {strides = array<i32>} : memref<16x1xf32, #tpu.memory_space<vmem>>, vector<16x1xf32>,
    %c0_21 = arith.constant 0 : index
    %c0_22 = arith.constant 0 : index
    %34 = vector.load %arg11[%c0_21, %c0_22] : memref<16x1xf32, #tpu.memory_space<vmem>>, vector<16x1xf32>
    tpu.vector_store %arg11[%c0_21, %c0_22], %22 {strides = array<i32>} : memref<16x1xf32, #tpu.memory_space<vmem>>, vector<16x1xf32>,
    %c0_23 = arith.constant 0 : index
    %c0_24 = arith.constant 0 : index
    %35 = vector.load %arg13[%c0_23, %c0_24] : memref<16x1xf32, #tpu.memory_space<vmem>>, vector<16x1xf32>
    %cst_25 = arith.constant 0.000000e+00 : f32
    %36 = vector.broadcast %cst_25 : f32 to vector<16x16xf32>
    %37 = arith.select %16, %5, %36 : vector<16x16xi1>, vector<16x16xf32>
    %cst_26 = arith.constant dense<0.000000e+00> : vector<16xf32>
    %38 = vector.multi_reduction <add>, %37, %cst_26 [1] : vector<16x16xf32> to vector<16xf32>
    %39 = vector.shape_cast %38 : vector<16xf32> to vector<16x1xf32>
    %40 = arith.addf %35, %39 : vector<16x1xf32>
    %c0_27 = arith.constant 0 : index
    %c0_28 = arith.constant 0 : index
    %41 = vector.load %arg13[%c0_27, %c0_28] : memref<16x1xf32, #tpu.memory_space<vmem>>, vector<16x1xf32>
    tpu.vector_store %arg13[%c0_27, %c0_28], %40 {strides = array<i32>} : memref<16x1xf32, #tpu.memory_space<vmem>>, vector<16x1xf32>,
    %c0_i32_29 = arith.constant 0 : i32
    %42 = arith.cmpi eq, %arg1, %c0_i32_29 : i32
    %43 = arith.extui %42 : i1 to i32
    %c0_i32_30 = arith.constant 0 : i32
    %44 = arith.cmpi ne, %43, %c0_i32_30 : i32
    scf.if %44 {
      %c0_31 = arith.constant 0 : index
      %c0_32 = arith.constant 0 : index
      %45 = vector.load %arg11[%c0_31, %c0_32] : memref<16x1xf32, #tpu.memory_space<vmem>>, vector<16x1xf32>
      %c0_33 = arith.constant 0 : index
      %c0_34 = arith.constant 0 : index
      %46 = vector.load %arg12[%c0_33, %c0_34] : memref<16x1xf32, #tpu.memory_space<vmem>>, vector<16x1xf32>
      %47 = math.log %46 : vector<16x1xf32>
      %48 = arith.addf %45, %47 : vector<16x1xf32>
      %c0_35 = arith.constant 0 : index
      %c0_36 = arith.constant 0 : index
      %49 = vector.load %arg6[%c0_35, %c0_36] : memref<16x1xf32, #tpu.memory_space<vmem>>, vector<16x1xf32>
      %cst_37 = arith.constant 0.000000e+00 : f32
      %50 = vector.broadcast %cst_37 : f32 to vector<16x1xf32>
      %51 = arith.cmpf ogt, %49, %50 : vector<16x1xf32>
      %c0_38 = arith.constant 0 : index
      %c0_39 = arith.constant 0 : index
      %52 = vector.load %arg13[%c0_38, %c0_39] : memref<16x1xf32, #tpu.memory_space<vmem>>, vector<16x1xf32>
      %53 = arith.mulf %49, %48 : vector<16x1xf32>
      %54 = arith.subf %52, %53 : vector<16x1xf32>
      %cst_40 = arith.constant 1.000000e+00 : f32
      %55 = vector.broadcast %cst_40 : f32 to vector<16x1xf32>
      %56 = arith.maximumf %49, %55 : vector<16x1xf32>
      %57 = arith.divf %54, %56 : vector<16x1xf32>
      %cst_41 = arith.constant 0.000000e+00 : f32
      %58 = vector.broadcast %cst_41 : f32 to vector<16x1xf32>
      %59 = arith.select %51, %57, %58 : vector<16x1xi1>, vector<16x1xf32>
      %cst_42 = arith.constant -1.000000e+00 : f32
      %60 = vector.broadcast %cst_42 : f32 to vector<16x1xf32>
      %61 = arith.mulf %60, %59 : vector<16x1xf32>
      %c0_43 = arith.constant 0 : index
      %c0_44 = arith.constant 0 : index
      %62 = vector.load %arg9[%c0_43, %c0_44] : memref<16x1xf32, #tpu.memory_space<vmem>>, vector<16x1xf32>
      tpu.vector_store %arg9[%c0_43, %c0_44], %61 {strides = array<i32>} : memref<16x1xf32, #tpu.memory_space<vmem>>, vector<16x1xf32>,
    } else {
    }
    return
  }
  func.func @transform_0(%arg0: i32, %arg1: i32) -> (i32, i32) {
    %c0_i32 = arith.constant 0 : i32
    %c0_i32_0 = arith.constant 0 : i32
    return %arg0, %c0_i32 : i32, i32
  }
  func.func @transform_1(%arg0: i32, %arg1: i32) -> (i32, i32) {
    %c0_i32 = arith.constant 0 : i32
    %c0_i32_0 = arith.constant 0 : i32
    return %c0_i32, %arg1 : i32, i32
  }
  func.func @transform_2(%arg0: i32, %arg1: i32) -> (i32, i32) {
    %c0_i32 = arith.constant 0 : i32
    %c0_i32_0 = arith.constant 0 : i32
    return %arg0, %c0_i32 : i32, i32
  }
  func.func @transform_3(%arg0: i32, %arg1: i32) -> (i32, i32) {
    %c0_i32 = arith.constant 0 : i32
    %c0_i32_0 = arith.constant 0 : i32
    return %c0_i32, %arg1 : i32, i32
  }
  func.func @transform_4(%arg0: i32, %arg1: i32) -> (i32, i32) {
    %c0_i32 = arith.constant 0 : i32
    %c0_i32_0 = arith.constant 0 : i32
    return %arg0, %c0_i32 : i32, i32
  }
  func.func @transform_5(%arg0: i32, %arg1: i32) -> (i32, i32) {
    %c0_i32 = arith.constant 0 : i32
    %c0_i32_0 = arith.constant 0 : i32
    return %arg0, %c0_i32 : i32, i32
  }
  func.func @transform_6(%arg0: i32, %arg1: i32) -> (i32, i32) {
    %c0_i32 = arith.constant 0 : i32
    %c0_i32_0 = arith.constant 0 : i32
    return %arg1, %c0_i32 : i32, i32
  }
  func.func @transform_7(%arg0: i32, %arg1: i32) -> (i32, i32) {
    %c0_i32 = arith.constant 0 : i32
    %c0_i32_0 = arith.constant 0 : i32
    return %arg0, %c0_i32 : i32, i32
  }
}

</mosaic_0001>

<llo_original>
// kernel: tpu_custom_call.1
$region0: #{tpu_custom_call.1}
  #allocation0 [shape = 'u32[]', space=smem, size = 0x4, offset = 0x4, fixed_abs, tag = 'smem constant byte address 0x4 - core index']
  #allocation1 [shape = 'u32[144,128]{1,0:T(1,128)}', space=vmem, size = 0x12000, scoped, tag = 'internal scratch']
  #allocation2 [shape = 'f32[16,32]{1,0:T(8,128)}', space=vmem, size = 0x2000, scoped, tag = 'scratch operand']
  #allocation3 [shape = 'f32[16,1]{1,0:T(8,128)}', space=vmem, size = 0x2000, scoped, tag = 'scratch operand']
  #allocation4 [shape = 'f32[16,1]{1,0:T(8,128)}', space=vmem, size = 0x2000, scoped, tag = 'scratch operand']
  #allocation5 [shape = 'f32[16,1]{1,0:T(8,128)}', space=vmem, size = 0x2000, scoped, tag = 'scratch operand']
  %s0 = inlined_call_operand.vmem [shape: s32[16,1], index: 0, kind: input, shape index: {}]
  %s1 = inlined_call_operand.vmem [shape: s32[1,16], index: 1, kind: input, shape index: {}]
  %s2 = inlined_call_operand.vmem [shape: s32[16,1], index: 2, kind: input, shape index: {}]
  %s3 = inlined_call_operand.vmem [shape: s32[1,16], index: 3, kind: input, shape index: {}]
  %s4 = inlined_call_operand.vmem [shape: f32[16,1], index: 4, kind: input, shape index: {}]
  %s5 = inlined_call_operand.vmem [shape: f32[16,32], index: 5, kind: input, shape index: {}]
  %s6 = inlined_call_operand.vmem [shape: f32[16,32], index: 6, kind: input, shape index: {}]
  %s7 = inlined_call_operand.vmem [shape: f32[16,1], index: 7, kind: output, shape index: {}]
  %s8 = sld [smem:[#allocation0]]
  $region46: #{tpu_custom_call.1} parent=0
    _
  %s10 = ssub.s32 1, %s8
  %s11 = scalar_select 0, %s10, %s8
  // Predicated region
  $region2: #{tpu_custom_call.1} parent=0 // pred_check
    _
  $region3: #{tpu_custom_call.1} parent=0 // pred_check_branch
    %13 = sbr.rel (0) target = $region5
  $region4: #{tpu_custom_call.1} parent=0 // pred_region
    _
  $region5: #{tpu_custom_call.1} parent=0 // pred_fallthru
    _
  // Predicated region
  $region6: #{tpu_custom_call.1} parent=0 // pred_check
    _
  $region7: #{tpu_custom_call.1} parent=0 // pred_check_branch
    %15 = sbr.rel (0) target = $region9
  $region8: #{tpu_custom_call.1} parent=0 // pred_region
    _
  $region9: #{tpu_custom_call.1} parent=0 // pred_fallthru
    _
  // Predicated region
  $region10: #{tpu_custom_call.1} parent=0 // pred_check
    _
  $region11: #{tpu_custom_call.1} parent=0 // pred_check_branch
    %17 = sbr.rel (0) target = $region13
  $region12: #{tpu_custom_call.1} parent=0 // pred_region
    _
  $region13: #{tpu_custom_call.1} parent=0 // pred_fallthru
    _
  // Predicated region
  $region14: #{tpu_custom_call.1} parent=0 // pred_check
    _
  $region15: #{tpu_custom_call.1} parent=0 // pred_check_branch
    %19 = sbr.rel (0) target = $region17
  $region16: #{tpu_custom_call.1} parent=0 // pred_region
    _
  $region17: #{tpu_custom_call.1} parent=0 // pred_fallthru
    _
  // Predicated region
  $region18: #{tpu_custom_call.1} parent=0 // pred_check
    _
  $region19: #{tpu_custom_call.1} parent=0 // pred_check_branch
    %21 = sbr.rel (0) target = $region21
  $region20: #{tpu_custom_call.1} parent=0 // pred_region
    _
  $region21: #{tpu_custom_call.1} parent=0 // pred_fallthru
    _
  // Predicated region
  $region22: #{tpu_custom_call.1} parent=0 // pred_check
    _
  $region23: #{tpu_custom_call.1} parent=0 // pred_check_branch
    %23 = sbr.rel (0) target = $region25
  $region24: #{tpu_custom_call.1} parent=0 // pred_region
    _
  $region25: #{tpu_custom_call.1} parent=0 // pred_fallthru
    _
  // Predicated region
  $region26: #{tpu_custom_call.1} parent=0 // pred_check
    _
  $region27: #{tpu_custom_call.1} parent=0 // pred_check_branch
    %25 = sbr.rel (0) target = $region29
  $region28: #{tpu_custom_call.1} parent=0 // pred_region
    _
  $region29: #{tpu_custom_call.1} parent=0 // pred_fallthru
    _
  %p26 = scmp.eq.s32.totalorder 0, 0
  // Predicated region
  $region30: #{tpu_custom_call.1} parent=0 // pred_check
    %p27 = pneg %p26
  $region31: #{tpu_custom_call.1} parent=0 // pred_check_branch
    %29 = sbr.rel (%p27) target = $region33
  $region32: #{tpu_custom_call.1} parent=0 // pred_region
    %v30 = vld [vmem:[%s5] sm:$0xff]
    %v31 = vld [vmem:[%s5 + $0x8] sm:$0xff]
    %v32 = vmul.f32 %v30, 14.285714
    %v33 = vmul.f32 %v31, 14.285714
    %vm34 = vcmask 261120
    %35 = vst.msk [vmem:[#allocation2] sm:$0xff] %vm34, %v32
    %36 = vst.msk [vmem:[#allocation2 + $0x8] sm:$0xff] %vm34, %v33
    %vm37 = vcmask 7168
    %38 = vst.msk [vmem:[#allocation3] sm:$0xff] %vm37, -inf
    %39 = vst.msk [vmem:[#allocation3 + $0x8] sm:$0xff] %vm37, -inf
    %40 = vst.msk [vmem:[#allocation4] sm:$0xff] %vm37, 0.0
    %41 = vst.msk [vmem:[#allocation4 + $0x8] sm:$0xff] %vm37, 0.0
    %42 = vst.msk [vmem:[#allocation5] sm:$0xff] %vm37, 0.0
    %43 = vst.msk [vmem:[#allocation5 + $0x8] sm:$0xff] %vm37, 0.0
  $region33: #{tpu_custom_call.1} parent=0 // pred_fallthru
    _
  %v44 = vld [vmem:[#allocation2] sm:$0xff]
  %v45 = vld [vmem:[#allocation2 + $0x8] sm:$0xff]
  %v46 = vld [vmem:[%s6] sm:$0xff]
  %v47 = vld [vmem:[%s6 + $0x8] sm:$0xff]
  %vm48 = vcmask 261120
  %v50 = vsel %vm48, %v44, 0
  %v53 = vsel %vm48, %v45, 0
  %v56 = vsel %vm48, %v46, 0
  %v59 = vsel %vm48, %v47, 0
  %61 = vmatprep.subr.mxu0 0.0
  %v62 = vand.u32 %v56, 4294901760
  %63 = vmatpush1.xpose.msra.mxu0 %v62
  %64 = vmatprep.subr.mxu0 0.0
  %v65 = vand.u32 %v59, 4294901760
  %66 = vmatpush1.xpose.msra.mxu0 %v65
  %67 = vmatprep.subr.mxu0 0.0
  %68 = vmatpush1.xpose.msra.mxu0 0.0
  %69 = vmatprep.subr.mxu0 0.0
  %70 = vmatpush1.xpose.msra.mxu0 0.0
  %71 = vmatprep.subr.mxu0 0.0
  %72 = vmatpush1.xpose.msra.mxu0 0.0
  %73 = vmatprep.subr.mxu0 0.0
  %74 = vmatpush1.xpose.msra.mxu0 0.0
  %75 = vmatprep.subr.mxu0 0.0
  %76 = vmatpush1.xpose.msra.mxu0 0.0
  %77 = vmatprep.subr.mxu0 0.0
  %78 = vmatpush1.xpose.msra.mxu0 0.0
  %79 = vmatprep.subr.mxu0 0.0
  %80 = vmatpush1.xpose.msra.mxu0 0.0
  %81 = vmatprep.subr.mxu0 0.0
  %82 = vmatpush1.xpose.msra.mxu0 0.0
  %83 = vmatprep.subr.mxu0 0.0
  %84 = vmatpush1.xpose.msra.mxu0 0.0
  %85 = vmatprep.subr.mxu0 0.0
  %86 = vmatpush1.xpose.msra.mxu0 0.0
  %87 = vmatprep.subr.mxu0 0.0
  %88 = vmatpush1.xpose.msra.mxu0 0.0
  %89 = vmatprep.subr.mxu0 0.0
  %90 = vmatpush1.xpose.msra.mxu0 0.0
  %91 = vmatprep.subr.mxu0 0.0
  %92 = vmatpush1.xpose.msra.mxu0 0.0
  %93 = vmatprep.subr.mxu0 0.0
  %94 = vmatpush1.xpose.msra.mxu0 0.0
  %95 = vmatprep.subr.mxu0 0.0
  %96 = vmatpush1.xpose.msra.mxu0 0.0
  %97 = vmatprep.subr.mxu0 0.0
  %98 = vmatpush1.xpose.msra.mxu0 0.0
  %99 = vmatprep.subr.mxu0 0.0
  %100 = vmatpush1.xpose.msra.mxu0 0.0
  %101 = vmatprep.subr.mxu0 0.0
  %102 = vmatpush1.xpose.msra.mxu0 0.0
  %103 = vmatprep.subr.mxu0 0.0
  %104 = vmatpush1.xpose.msra.mxu0 0.0
  %105 = vmatprep.subr.mxu0 0.0
  %106 = vmatpush1.xpose.msra.mxu0 0.0
  %107 = vmatprep.subr.mxu0 0.0
  %108 = vmatpush1.xpose.msra.mxu0 0.0
  %109 = vmatprep.subr.mxu0 0.0
  %110 = vmatpush1.xpose.msra.mxu0 0.0
  %111 = vmatprep.subr.mxu0 0.0
  %112 = vmatpush1.xpose.msra.mxu0 0.0
  %113 = vmatprep.subr.mxu0 0.0
  %114 = vmatpush1.xpose.msra.mxu0 0.0
  %115 = vmatprep.subr.mxu0 0.0
  %116 = vmatpush1.xpose.msra.mxu0 0.0
  %117 = vmatprep.subr.mxu0 0.0
  %118 = vmatpush1.xpose.msra.mxu0 0.0
  %119 = vmatprep.subr.mxu0 0.0
  %120 = vmatpush1.xpose.msra.mxu0 0.0
  %121 = vmatprep.subr.mxu0 0.0
  %122 = vmatpush1.xpose.msra.mxu0 0.0
  %123 = vmatprep.subr.mxu0 0.0
  %124 = vmatpush1.xpose.msra.mxu0 0.0
  %125 = vmatprep.subr.mxu0 0.0
  %126 = vmatpush1.xpose.msra.mxu0 0.0
  %127 = vmatprep.mubr.f32.mxu0 0.0
  %v128 = vand.u32 %v50, 4294901760
  %v129 = vsub.f32 %v50, %v128
  %v130 = vand.u32 %v129, 4294901760
  %v131 = vsub.f32 %v129, %v130
  %v132 = vand.u32 %v131, 4294901760
  %133 = vmatmul.mubr.f32.gmra.mrb[0].mxu0 %v132
  %v134 = vpop.f32.mrb[0].mxu0
  %v135 = vadd.f32 0.0, %v134
  %v136 = vpop.f32.mrb[0].mxu0
  %137 = vmatprep.mubr.f32.mxu0 0.0
  %v138 = vand.u32 %v53, 4294901760
  %v139 = vsub.f32 %v53, %v138
  %v140 = vand.u32 %v139, 4294901760
  %v141 = vsub.f32 %v139, %v140
  %v142 = vand.u32 %v141, 4294901760
  %143 = vmatmul.mubr.f32.gmra.mrb[0].mxu0 %v142
  %v144 = vpop.f32.mrb[0].mxu0
  %v145 = vadd.f32 0.0, %v144
  %v146 = vpop.f32.mrb[0].mxu0
  %147 = vdwg.mxu0
  %148 = vmatprep.subr.mxu0 0.0
  %v149 = vand.u32 %v56, 4294901760
  %v150 = vsub.f32 %v56, %v149
  %v151 = vand.u32 %v150, 4294901760
  %v152 = vsub.f32 %v150, %v151
  %v153 = vand.u32 %v152, 4294901760
  %154 = vmatpush1.xpose.msra.mxu0 %v153
  %155 = vmatprep.subr.mxu0 0.0
  %v156 = vand.u32 %v59, 4294901760
  %v157 = vsub.f32 %v59, %v156
  %v158 = vand.u32 %v157, 4294901760
  %v159 = vsub.f32 %v157, %v158
  %v160 = vand.u32 %v159, 4294901760
  %161 = vmatpush1.xpose.msra.mxu0 %v160
  %162 = vmatprep.subr.mxu0 0.0
  %163 = vmatpush1.xpose.msra.mxu0 0.0
  %164 = vmatprep.subr.mxu0 0.0
  %165 = vmatpush1.xpose.msra.mxu0 0.0
  %166 = vmatprep.subr.mxu0 0.0
  %167 = vmatpush1.xpose.msra.mxu0 0.0
  %168 = vmatprep.subr.mxu0 0.0
  %169 = vmatpush1.xpose.msra.mxu0 0.0
  %170 = vmatprep.subr.mxu0 0.0
  %171 = vmatpush1.xpose.msra.mxu0 0.0
  %172 = vmatprep.subr.mxu0 0.0
  %173 = vmatpush1.xpose.msra.mxu0 0.0
  %174 = vmatprep.subr.mxu0 0.0
  %175 = vmatpush1.xpose.msra.mxu0 0.0
  %176 = vmatprep.subr.mxu0 0.0
  %177 = vmatpush1.xpose.msra.mxu0 0.0
  %178 = vmatprep.subr.mxu0 0.0
  %179 = vmatpush1.xpose.msra.mxu0 0.0
  %180 = vmatprep.subr.mxu0 0.0
  %181 = vmatpush1.xpose.msra.mxu0 0.0
  %182 = vmatprep.subr.mxu0 0.0
  %183 = vmatpush1.xpose.msra.mxu0 0.0
  %184 = vmatprep.subr.mxu0 0.0
  %185 = vmatpush1.xpose.msra.mxu0 0.0
  %186 = vmatprep.subr.mxu0 0.0
  %187 = vmatpush1.xpose.msra.mxu0 0.0
  %188 = vmatprep.subr.mxu0 0.0
  %189 = vmatpush1.xpose.msra.mxu0 0.0
  %190 = vmatprep.subr.mxu0 0.0
  %191 = vmatpush1.xpose.msra.mxu0 0.0
  %192 = vmatprep.subr.mxu0 0.0
  %193 = vmatpush1.xpose.msra.mxu0 0.0
  %194 = vmatprep.subr.mxu0 0.0
  %195 = vmatpush1.xpose.msra.mxu0 0.0
  %196 = vmatprep.subr.mxu0 0.0
  %197 = vmatpush1.xpose.msra.mxu0 0.0
  %198 = vmatprep.subr.mxu0 0.0
  %199 = vmatpush1.xpose.msra.mxu0 0.0
  %200 = vmatprep.subr.mxu0 0.0
  %201 = vmatpush1.xpose.msra.mxu0 0.0
  %202 = vmatprep.subr.mxu0 0.0
  %203 = vmatpush1.xpose.msra.mxu0 0.0
  %204 = vmatprep.subr.mxu0 0.0
  %205 = vmatpush1.xpose.msra.mxu0 0.0
  %206 = vmatprep.subr.mxu0 0.0
  %207 = vmatpush1.xpose.msra.mxu0 0.0
  %208 = vmatprep.subr.mxu0 0.0
  %209 = vmatpush1.xpose.msra.mxu0 0.0
  %210 = vmatprep.subr.mxu0 0.0
  %211 = vmatpush1.xpose.msra.mxu0 0.0
  %212 = vmatprep.subr.mxu0 0.0
  %213 = vmatpush1.xpose.msra.mxu0 0.0
  %214 = vmatprep.subr.mxu0 0.0
  %215 = vmatpush1.xpose.msra.mxu0 0.0
  %216 = vmatprep.subr.mxu0 0.0
  %217 = vmatpush1.xpose.msra.mxu0 0.0
  %218 = vmatprep.subr.mxu0 0.0
  %219 = vmatpush1.xpose.msra.mxu0 0.0
  %220 = vmatprep.subr.mxu0 0.0
  %221 = vmatpush1.xpose.msra.mxu0 0.0
  %222 = vmatprep.mubr.f32.mxu0 0.0
  %v223 = vand.u32 %v50, 4294901760
  %224 = vmatmul.mubr.f32.gmra.mrb[0].mxu0 %v223
  %v225 = vpop.f32.mrb[0].mxu0
  %v226 = vadd.f32 %v135, %v225
  %v227 = vpop.f32.mrb[0].mxu0
  %228 = vmatprep.mubr.f32.mxu0 0.0
  %v229 = vand.u32 %v53, 4294901760
  %230 = vmatmul.mubr.f32.gmra.mrb[0].mxu0 %v229
  %v231 = vpop.f32.mrb[0].mxu0
  %v232 = vadd.f32 %v145, %v231
  %v233 = vpop.f32.mrb[0].mxu0
  %234 = vdwg.mxu0
  %235 = vmatprep.subr.mxu0 0.0
  %v236 = vand.u32 %v56, 4294901760
  %v237 = vsub.f32 %v56, %v236
  %238 = vmatpush1.xpose.msra.mxu0 %v237
  %239 = vmatprep.subr.mxu0 0.0
  %v240 = vand.u32 %v59, 4294901760
  %v241 = vsub.f32 %v59, %v240
  %242 = vmatpush1.xpose.msra.mxu0 %v241
  %243 = vmatprep.subr.mxu0 0.0
  %244 = vmatpush1.xpose.msra.mxu0 0.0
  %245 = vmatprep.subr.mxu0 0.0
  %246 = vmatpush1.xpose.msra.mxu0 0.0
  %247 = vmatprep.subr.mxu0 0.0
  %248 = vmatpush1.xpose.msra.mxu0 0.0
  %249 = vmatprep.subr.mxu0 0.0
  %250 = vmatpush1.xpose.msra.mxu0 0.0
  %251 = vmatprep.subr.mxu0 0.0
  %252 = vmatpush1.xpose.msra.mxu0 0.0
  %253 = vmatprep.subr.mxu0 0.0
  %254 = vmatpush1.xpose.msra.mxu0 0.0
  %255 = vmatprep.subr.mxu0 0.0
  %256 = vmatpush1.xpose.msra.mxu0 0.0
  %257 = vmatprep.subr.mxu0 0.0
  %258 = vmatpush1.xpose.msra.mxu0 0.0
  %259 = vmatprep.subr.mxu0 0.0
  %260 = vmatpush1.xpose.msra.mxu0 0.0
  %261 = vmatprep.subr.mxu0 0.0
  %262 = vmatpush1.xpose.msra.mxu0 0.0
  %263 = vmatprep.subr.mxu0 0.0
  %264 = vmatpush1.xpose.msra.mxu0 0.0
  %265 = vmatprep.subr.mxu0 0.0
  %266 = vmatpush1.xpose.msra.mxu0 0.0
  %267 = vmatprep.subr.mxu0 0.0
  %268 = vmatpush1.xpose.msra.mxu0 0.0
  %269 = vmatprep.subr.mxu0 0.0
  %270 = vmatpush1.xpose.msra.mxu0 0.0
  %271 = vmatprep.subr.mxu0 0.0
  %272 = vmatpush1.xpose.msra.mxu0 0.0
  %273 = vmatprep.subr.mxu0 0.0
  %274 = vmatpush1.xpose.msra.mxu0 0.0
  %275 = vmatprep.subr.mxu0 0.0
  %276 = vmatpush1.xpose.msra.mxu0 0.0
  %277 = vmatprep.subr.mxu0 0.0
  %278 = vmatpush1.xpose.msra.mxu0 0.0
  %279 = vmatprep.subr.mxu0 0.0
  %280 = vmatpush1.xpose.msra.mxu0 0.0
  %281 = vmatprep.subr.mxu0 0.0
  %282 = vmatpush1.xpose.msra.mxu0 0.0
  %283 = vmatprep.subr.mxu0 0.0
  %284 = vmatpush1.xpose.msra.mxu0 0.0
  %285 = vmatprep.subr.mxu0 0.0
  %286 = vmatpush1.xpose.msra.mxu0 0.0
  %287 = vmatprep.subr.mxu0 0.0
  %288 = vmatpush1.xpose.msra.mxu0 0.0
  %289 = vmatprep.subr.mxu0 0.0
  %290 = vmatpush1.xpose.msra.mxu0 0.0
  %291 = vmatprep.subr.mxu0 0.0
  %292 = vmatpush1.xpose.msra.mxu0 0.0
  %293 = vmatprep.subr.mxu0 0.0
  %294 = vmatpush1.xpose.msra.mxu0 0.0
  %295 = vmatprep.subr.mxu0 0.0
  %296 = vmatpush1.xpose.msra.mxu0 0.0
  %297 = vmatprep.subr.mxu0 0.0
  %298 = vmatpush1.xpose.msra.mxu0 0.0
  %299 = vmatprep.subr.mxu0 0.0
  %300 = vmatpush1.xpose.msra.mxu0 0.0
  %301 = vmatprep.subr.mxu0 0.0
  %302 = vmatpush1.xpose.msra.mxu0 0.0
  %303 = vmatprep.mubr.f32.mxu0 0.0
  %v304 = vand.u32 %v50, 4294901760
  %v305 = vsub.f32 %v50, %v304
  %306 = vmatmul.mubr.f32.gmra.mrb[0].mxu0 %v305
  %v307 = vpop.f32.mrb[0].mxu0
  %v308 = vadd.f32 %v226, %v307
  %v309 = vpop.f32.mrb[0].mxu0
  %310 = vmatprep.mubr.f32.mxu0 0.0
  %v311 = vand.u32 %v53, 4294901760
  %v312 = vsub.f32 %v53, %v311
  %313 = vmatmul.mubr.f32.gmra.mrb[0].mxu0 %v312
  %v314 = vpop.f32.mrb[0].mxu0
  %v315 = vadd.f32 %v232, %v314
  %v316 = vpop.f32.mrb[0].mxu0
  %317 = vdwg.mxu0
  %318 = vmatprep.subr.mxu0 0.0
  %v319 = vand.u32 %v56, 4294901760
  %320 = vmatpush1.xpose.msra.mxu0 %v319
  %321 = vmatprep.subr.mxu0 0.0
  %v322 = vand.u32 %v59, 4294901760
  %323 = vmatpush1.xpose.msra.mxu0 %v322
  %324 = vmatprep.subr.mxu0 0.0
  %325 = vmatpush1.xpose.msra.mxu0 0.0
  %326 = vmatprep.subr.mxu0 0.0
  %327 = vmatpush1.xpose.msra.mxu0 0.0
  %328 = vmatprep.subr.mxu0 0.0
  %329 = vmatpush1.xpose.msra.mxu0 0.0
  %330 = vmatprep.subr.mxu0 0.0
  %331 = vmatpush1.xpose.msra.mxu0 0.0
  %332 = vmatprep.subr.mxu0 0.0
  %333 = vmatpush1.xpose.msra.mxu0 0.0
  %334 = vmatprep.subr.mxu0 0.0
  %335 = vmatpush1.xpose.msra.mxu0 0.0
  %336 = vmatprep.subr.mxu0 0.0
  %337 = vmatpush1.xpose.msra.mxu0 0.0
  %338 = vmatprep.subr.mxu0 0.0
  %339 = vmatpush1.xpose.msra.mxu0 0.0
  %340 = vmatprep.subr.mxu0 0.0
  %341 = vmatpush1.xpose.msra.mxu0 0.0
  %342 = vmatprep.subr.mxu0 0.0
  %343 = vmatpush1.xpose.msra.mxu0 0.0
  %344 = vmatprep.subr.mxu0 0.0
  %345 = vmatpush1.xpose.msra.mxu0 0.0
  %346 = vmatprep.subr.mxu0 0.0
  %347 = vmatpush1.xpose.msra.mxu0 0.0
  %348 = vmatprep.subr.mxu0 0.0
  %349 = vmatpush1.xpose.msra.mxu0 0.0
  %350 = vmatprep.subr.mxu0 0.0
  %351 = vmatpush1.xpose.msra.mxu0 0.0
  %352 = vmatprep.subr.mxu0 0.0
  %353 = vmatpush1.xpose.msra.mxu0 0.0
  %354 = vmatprep.subr.mxu0 0.0
  %355 = vmatpush1.xpose.msra.mxu0 0.0
  %356 = vmatprep.subr.mxu0 0.0
  %357 = vmatpush1.xpose.msra.mxu0 0.0
  %358 = vmatprep.subr.mxu0 0.0
  %359 = vmatpush1.xpose.msra.mxu0 0.0
  %360 = vmatprep.subr.mxu0 0.0
  %361 = vmatpush1.xpose.msra.mxu0 0.0
  %362 = vmatprep.subr.mxu0 0.0
  %363 = vmatpush1.xpose.msra.mxu0 0.0
  %364 = vmatprep.subr.mxu0 0.0
  %365 = vmatpush1.xpose.msra.mxu0 0.0
  %366 = vmatprep.subr.mxu0 0.0
  %367 = vmatpush1.xpose.msra.mxu0 0.0
  %368 = vmatprep.subr.mxu0 0.0
  %369 = vmatpush1.xpose.msra.mxu0 0.0
  %370 = vmatprep.subr.mxu0 0.0
  %371 = vmatpush1.xpose.msra.mxu0 0.0
  %372 = vmatprep.subr.mxu0 0.0
  %373 = vmatpush1.xpose.msra.mxu0 0.0
  %374 = vmatprep.subr.mxu0 0.0
  %375 = vmatpush1.xpose.msra.mxu0 0.0
  %376 = vmatprep.subr.mxu0 0.0
  %377 = vmatpush1.xpose.msra.mxu0 0.0
  %378 = vmatprep.subr.mxu0 0.0
  %379 = vmatpush1.xpose.msra.mxu0 0.0
  %380 = vmatprep.subr.mxu0 0.0
  %381 = vmatpush1.xpose.msra.mxu0 0.0
  %382 = vmatprep.subr.mxu0 0.0
  %383 = vmatpush1.xpose.msra.mxu0 0.0
  %384 = vmatprep.mubr.f32.mxu0 0.0
  %v385 = vand.u32 %v50, 4294901760
  %v386 = vsub.f32 %v50, %v385
  %v387 = vand.u32 %v386, 4294901760
  %388 = vmatmul.mubr.f32.gmra.mrb[0].mxu0 %v387
  %v389 = vpop.f32.mrb[0].mxu0
  %v390 = vadd.f32 %v308, %v389
  %v391 = vpop.f32.mrb[0].mxu0
  %392 = vmatprep.mubr.f32.mxu0 0.0
  %v393 = vand.u32 %v53, 4294901760
  %v394 = vsub.f32 %v53, %v393
  %v395 = vand.u32 %v394, 4294901760
  %396 = vmatmul.mubr.f32.gmra.mrb[0].mxu0 %v395
  %v397 = vpop.f32.mrb[0].mxu0
  %v398 = vadd.f32 %v315, %v397
  %v399 = vpop.f32.mrb[0].mxu0
  %400 = vdwg.mxu0
  %401 = vmatprep.subr.mxu0 0.0
  %v402 = vand.u32 %v56, 4294901760
  %v403 = vsub.f32 %v56, %v402
  %v404 = vand.u32 %v403, 4294901760
  %405 = vmatpush1.xpose.msra.mxu0 %v404
  %406 = vmatprep.subr.mxu0 0.0
  %v407 = vand.u32 %v59, 4294901760
  %v408 = vsub.f32 %v59, %v407
  %v409 = vand.u32 %v408, 4294901760
  %410 = vmatpush1.xpose.msra.mxu0 %v409
  %411 = vmatprep.subr.mxu0 0.0
  %412 = vmatpush1.xpose.msra.mxu0 0.0
  %413 = vmatprep.subr.mxu0 0.0
  %414 = vmatpush1.xpose.msra.mxu0 0.0
  %415 = vmatprep.subr.mxu0 0.0
  %416 = vmatpush1.xpose.msra.mxu0 0.0
  %417 = vmatprep.subr.mxu0 0.0
  %418 = vmatpush1.xpose.msra.mxu0 0.0
  %419 = vmatprep.subr.mxu0 0.0
  %420 = vmatpush1.xpose.msra.mxu0 0.0
  %421 = vmatprep.subr.mxu0 0.0
  %422 = vmatpush1.xpose.msra.mxu0 0.0
  %423 = vmatprep.subr.mxu0 0.0
  %424 = vmatpush1.xpose.msra.mxu0 0.0
  %425 = vmatprep.subr.mxu0 0.0
  %426 = vmatpush1.xpose.msra.mxu0 0.0
  %427 = vmatprep.subr.mxu0 0.0
  %428 = vmatpush1.xpose.msra.mxu0 0.0
  %429 = vmatprep.subr.mxu0 0.0
  %430 = vmatpush1.xpose.msra.mxu0 0.0
  %431 = vmatprep.subr.mxu0 0.0
  %432 = vmatpush1.xpose.msra.mxu0 0.0
  %433 = vmatprep.subr.mxu0 0.0
  %434 = vmatpush1.xpose.msra.mxu0 0.0
  %435 = vmatprep.subr.mxu0 0.0
  %436 = vmatpush1.xpose.msra.mxu0 0.0
  %437 = vmatprep.subr.mxu0 0.0
  %438 = vmatpush1.xpose.msra.mxu0 0.0
  %439 = vmatprep.subr.mxu0 0.0
  %440 = vmatpush1.xpose.msra.mxu0 0.0
  %441 = vmatprep.subr.mxu0 0.0
  %442 = vmatpush1.xpose.msra.mxu0 0.0
  %443 = vmatprep.subr.mxu0 0.0
  %444 = vmatpush1.xpose.msra.mxu0 0.0
  %445 = vmatprep.subr.mxu0 0.0
  %446 = vmatpush1.xpose.msra.mxu0 0.0
  %447 = vmatprep.subr.mxu0 0.0
  %448 = vmatpush1.xpose.msra.mxu0 0.0
  %449 = vmatprep.subr.mxu0 0.0
  %450 = vmatpush1.xpose.msra.mxu0 0.0
  %451 = vmatprep.subr.mxu0 0.0
  %452 = vmatpush1.xpose.msra.mxu0 0.0
  %453 = vmatprep.subr.mxu0 0.0
  %454 = vmatpush1.xpose.msra.mxu0 0.0
  %455 = vmatprep.subr.mxu0 0.0
  %456 = vmatpush1.xpose.msra.mxu0 0.0
  %457 = vmatprep.subr.mxu0 0.0
  %458 = vmatpush1.xpose.msra.mxu0 0.0
  %459 = vmatprep.subr.mxu0 0.0
  %460 = vmatpush1.xpose.msra.mxu0 0.0
  %461 = vmatprep.subr.mxu0 0.0
  %462 = vmatpush1.xpose.msra.mxu0 0.0
  %463 = vmatprep.subr.mxu0 0.0
  %464 = vmatpush1.xpose.msra.mxu0 0.0
  %465 = vmatprep.subr.mxu0 0.0
  %466 = vmatpush1.xpose.msra.mxu0 0.0
  %467 = vmatprep.subr.mxu0 0.0
  %468 = vmatpush1.xpose.msra.mxu0 0.0
  %469 = vmatprep.subr.mxu0 0.0
  %470 = vmatpush1.xpose.msra.mxu0 0.0
  %471 = vmatprep.mubr.f32.mxu0 0.0
  %v472 = vand.u32 %v50, 4294901760
  %473 = vmatmul.mubr.f32.gmra.mrb[0].mxu0 %v472
  %v474 = vpop.f32.mrb[0].mxu0
  %v475 = vadd.f32 %v390, %v474
  %v476 = vpop.f32.mrb[0].mxu0
  %477 = vmatprep.mubr.f32.mxu0 0.0
  %v478 = vand.u32 %v53, 4294901760
  %479 = vmatmul.mubr.f32.gmra.mrb[0].mxu0 %v478
  %v480 = vpop.f32.mrb[0].mxu0
  %v481 = vadd.f32 %v398, %v480
  %v482 = vpop.f32.mrb[0].mxu0
  %483 = vdwg.mxu0
  %484 = vmatprep.subr.mxu0 0.0
  %v485 = vand.u32 %v56, 4294901760
  %486 = vmatpush1.xpose.msra.mxu0 %v485
  %487 = vmatprep.subr.mxu0 0.0
  %v488 = vand.u32 %v59, 4294901760
  %489 = vmatpush1.xpose.msra.mxu0 %v488
  %490 = vmatprep.subr.mxu0 0.0
  %491 = vmatpush1.xpose.msra.mxu0 0.0
  %492 = vmatprep.subr.mxu0 0.0
  %493 = vmatpush1.xpose.msra.mxu0 0.0
  %494 = vmatprep.subr.mxu0 0.0
  %495 = vmatpush1.xpose.msra.mxu0 0.0
  %496 = vmatprep.subr.mxu0 0.0
  %497 = vmatpush1.xpose.msra.mxu0 0.0
  %498 = vmatprep.subr.mxu0 0.0
  %499 = vmatpush1.xpose.msra.mxu0 0.0
  %500 = vmatprep.subr.mxu0 0.0
  %501 = vmatpush1.xpose.msra.mxu0 0.0
  %502 = vmatprep.subr.mxu0 0.0
  %503 = vmatpush1.xpose.msra.mxu0 0.0
  %504 = vmatprep.subr.mxu0 0.0
  %505 = vmatpush1.xpose.msra.mxu0 0.0
  %506 = vmatprep.subr.mxu0 0.0
  %507 = vmatpush1.xpose.msra.mxu0 0.0
  %508 = vmatprep.subr.mxu0 0.0
  %509 = vmatpush1.xpose.msra.mxu0 0.0
  %510 = vmatprep.subr.mxu0 0.0
  %511 = vmatpush1.xpose.msra.mxu0 0.0
  %512 = vmatprep.subr.mxu0 0.0
  %513 = vmatpush1.xpose.msra.mxu0 0.0
  %514 = vmatprep.subr.mxu0 0.0
  %515 = vmatpush1.xpose.msra.mxu0 0.0
  %516 = vmatprep.subr.mxu0 0.0
  %517 = vmatpush1.xpose.msra.mxu0 0.0
  %518 = vmatprep.subr.mxu0 0.0
  %519 = vmatpush1.xpose.msra.mxu0 0.0
  %520 = vmatprep.subr.mxu0 0.0
  %521 = vmatpush1.xpose.msra.mxu0 0.0
  %522 = vmatprep.subr.mxu0 0.0
  %523 = vmatpush1.xpose.msra.mxu0 0.0
  %524 = vmatprep.subr.mxu0 0.0
  %525 = vmatpush1.xpose.msra.mxu0 0.0
  %526 = vmatprep.subr.mxu0 0.0
  %527 = vmatpush1.xpose.msra.mxu0 0.0
  %528 = vmatprep.subr.mxu0 0.0
  %529 = vmatpush1.xpose.msra.mxu0 0.0
  %530 = vmatprep.subr.mxu0 0.0
  %531 = vmatpush1.xpose.msra.mxu0 0.0
  %532 = vmatprep.subr.mxu0 0.0
  %533 = vmatpush1.xpose.msra.mxu0 0.0
  %534 = vmatprep.subr.mxu0 0.0
  %535 = vmatpush1.xpose.msra.mxu0 0.0
  %536 = vmatprep.subr.mxu0 0.0
  %537 = vmatpush1.xpose.msra.mxu0 0.0
  %538 = vmatprep.subr.mxu0 0.0
  %539 = vmatpush1.xpose.msra.mxu0 0.0
  %540 = vmatprep.subr.mxu0 0.0
  %541 = vmatpush1.xpose.msra.mxu0 0.0
  %542 = vmatprep.subr.mxu0 0.0
  %543 = vmatpush1.xpose.msra.mxu0 0.0
  %544 = vmatprep.subr.mxu0 0.0
  %545 = vmatpush1.xpose.msra.mxu0 0.0
  %546 = vmatprep.subr.mxu0 0.0
  %547 = vmatpush1.xpose.msra.mxu0 0.0
  %548 = vmatprep.subr.mxu0 0.0
  %549 = vmatpush1.xpose.msra.mxu0 0.0
  %550 = vmatprep.mubr.f32.mxu0 0.0
  %v551 = vand.u32 %v50, 4294901760
  %552 = vmatmul.mubr.f32.gmra.mrb[0].mxu0 %v551
  %v553 = vpop.f32.mrb[0].mxu0
  %v554 = vadd.f32 %v475, %v553
  %v555 = vpop.f32.mrb[0].mxu0
  %556 = vmatprep.mubr.f32.mxu0 0.0
  %v557 = vand.u32 %v53, 4294901760
  %558 = vmatmul.mubr.f32.gmra.mrb[0].mxu0 %v557
  %v559 = vpop.f32.mrb[0].mxu0
  %v560 = vadd.f32 %v481, %v559
  %v561 = vpop.f32.mrb[0].mxu0
  %562 = vdwg.mxu0
  %v563 = vld [vmem:[%s2] sm:$0xff]
  %v564 = vld [vmem:[%s2 + $0x8] sm:$0xff]
  %v565 = vld [vmem:[%s3] sm:$0x1]
  %566 = vset.pattern.permute.xlu0 0
  %567 = vperm.xlu0 %566, %v563
  %v568 = vpop.permute.xlu0 %567
  %569 = vset.pattern.permute.xlu0 0
  %570 = vperm.xlu0 %569, %v564
  %v571 = vpop.permute.xlu0 %570
  %v572 = vlaneseq
  %v573 = vshrl.u32 %v572, 7
  %v574 = vsub.s32 0, %v573
  %v575 = vrot.slane %v565, %v574
  %vm576 = vcmp.ne.s32.totalorder %v568, %v575
  %vm577 = vcmp.ne.s32.totalorder %v571, %v575
  %v578 = vld [vmem:[%s0] sm:$0xff]
  %v579 = vld [vmem:[%s0 + $0x8] sm:$0xff]
  %v580 = vld [vmem:[%s1] sm:$0x1]
  %581 = vset.pattern.permute.xlu0 0
  %582 = vperm.xlu0 %581, %v578
  %v583 = vpop.permute.xlu0 %582
  %584 = vset.pattern.permute.xlu0 0
  %585 = vperm.xlu0 %584, %v579
  %v586 = vpop.permute.xlu0 %585
  %v587 = vlaneseq
  %v588 = vshrl.u32 %v587, 7
  %v589 = vsub.s32 0, %v588
  %v590 = vrot.slane %v580, %v589
  %vm591 = vcmp.eq.s32.totalorder %v583, %v590
  %vm592 = vcmp.eq.s32.totalorder %v586, %v590
  %vm593 = vmand %vm591, %vm576
  %vm594 = vmand %vm592, %vm577
  %v595 = vsel %vm576, %v554, -1e+30
  %v596 = vsel %vm577, %v560, -1e+30
  %v597 = vld [vmem:[#allocation3] sm:$0xff]
  %v598 = vld [vmem:[#allocation3 + $0x8] sm:$0xff]
  %vm599 = vcmask 130048
  %v600 = vsel %vm599, %v595, -inf
  %601 = vmax.xlane.f32.xlu0 %v600
  %v602 = vpop.xlane.xlu0 %601
  %v603 = vsel %vm599, %v596, -inf
  %604 = vmax.xlane.f32.xlu0 %v603
  %v605 = vpop.xlane.xlu0 %604
  %v606 = vmax.f32 %v597, %v602
  %v607 = vmax.f32 %v598, %v605
  %609 = vset.pattern.permute.xlu0 0
  %610 = vperm.xlu0 %609, %v606
  %v611 = vpop.permute.xlu0 %610
  %614 = vset.pattern.permute.xlu0 0
  %615 = vperm.xlu0 %614, %v607
  %v616 = vpop.permute.xlu0 %615
  %v618 = vsub.f32 %v595, %v611
  %v619 = vsub.f32 %v596, %v616
  %v620 = vmul.f32 %v618, 1.442695
  %v621 = vpow.pop %v620
  %v622 = vmul.f32 %v619, 1.442695
  %v623 = vpow.pop %v622
  %v624 = vsub.f32 %v597, %v606
  %v625 = vsub.f32 %v598, %v607
  %v626 = vmul.f32 %v624, 1.442695
  %v627 = vpow.pop %v626
  %v628 = vmul.f32 %v625, 1.442695
  %v629 = vpow.pop %v628
  %v630 = vld [vmem:[#allocation4] sm:$0xff]
  %v631 = vld [vmem:[#allocation4 + $0x8] sm:$0xff]
  %v632 = vmul.f32 %v630, %v627
  %v633 = vmul.f32 %v631, %v629
  %v634 = vsel %vm599, %v621, 0.0
  %635 = vadd.xlane.f32.xlu0 %v634
  %v636 = vpop.xlane.xlu0 %635
  %v637 = vsel %vm599, %v623, 0.0
  %638 = vadd.xlane.f32.xlu0 %v637
  %v639 = vpop.xlane.xlu0 %638
  %v640 = vadd.f32 %v632, %v636
  %v641 = vadd.f32 %v633, %v639
  %vm642 = vcmask 7168
  %643 = vst.msk [vmem:[#allocation4] sm:$0xff] %vm642, %v640
  %644 = vst.msk [vmem:[#allocation4 + $0x8] sm:$0xff] %vm642, %v641
  %645 = vst.msk [vmem:[#allocation3] sm:$0xff] %vm642, %v606
  %646 = vst.msk [vmem:[#allocation3 + $0x8] sm:$0xff] %vm642, %v607
  %v647 = vld [vmem:[#allocation5] sm:$0xff]
  %v648 = vld [vmem:[#allocation5 + $0x8] sm:$0xff]
  %v649 = vsel %vm593, %v554, 0.0
  %v650 = vsel %vm594, %v560, 0.0
  %v651 = vsel %vm599, %v649, 0.0
  %652 = vadd.xlane.f32.xlu0 %v651
  %v653 = vpop.xlane.xlu0 %652
  %v654 = vsel %vm599, %v650, 0.0
  %655 = vadd.xlane.f32.xlu0 %v654
  %v656 = vpop.xlane.xlu0 %655
  %v657 = vadd.f32 %v647, %v653
  %v658 = vadd.f32 %v648, %v656
  %659 = vst.msk [vmem:[#allocation5] sm:$0xff] %vm642, %v657
  %660 = vst.msk [vmem:[#allocation5 + $0x8] sm:$0xff] %vm642, %v658
  // Predicated region
  $region34: #{tpu_custom_call.1} parent=0 // pred_check
    %p661 = pneg %p26
  $region35: #{tpu_custom_call.1} parent=0 // pred_check_branch
    %663 = sbr.rel (%p661) target = $region37
  $region36: #{tpu_custom_call.1} parent=0 // pred_region
    %v664 = vld [vmem:[#allocation3] sm:$0xff]
    %v665 = vld [vmem:[#allocation3 + $0x8] sm:$0xff]
    %v666 = vld [vmem:[#allocation4] sm:$0xff]
    %v667 = vld [vmem:[#allocation4 + $0x8] sm:$0xff]
    %v668 = vlog2.pop %v666
    %v669 = vmul.f32 %v668, 0.6931472
    %v670 = vlog2.pop %v667
    %v671 = vmul.f32 %v670, 0.6931472
    %v672 = vadd.f32 %v664, %v669
    %v673 = vadd.f32 %v665, %v671
    %v674 = vld [vmem:[%s4] sm:$0xff]
    %v675 = vld [vmem:[%s4 + $0x8] sm:$0xff]
    %vm676 = vcmp.gt.f32.partialorder %v674, 0.0
    %vm677 = vcmp.gt.f32.partialorder %v675, 0.0
    %v678 = vld [vmem:[#allocation5] sm:$0xff]
    %v679 = vld [vmem:[#allocation5 + $0x8] sm:$0xff]
    %v680 = vmul.f32 %v674, %v672
    %v681 = vmul.f32 %v675, %v673
    %v682 = vsub.f32 %v678, %v680
    %v683 = vsub.f32 %v679, %v681
    %v684 = vmax.f32 %v674, 1.0
    %v685 = vmax.f32 %v675, 1.0
    %v686 = vrcp.pop %v684
    %v687 = vmul.f32 %v682, %v686
    %v688 = vrcp.pop %v685
    %v689 = vmul.f32 %v683, %v688
    %v690 = vsel %vm676, %v687, 0.0
    %v691 = vsel %vm677, %v689, 0.0
    %v692 = vmul.f32 %v690, -1.0
    %v693 = vmul.f32 %v691, -1.0
    %694 = vst.msk [vmem:[%s7] sm:$0xff] %vm642, %v692
    %695 = vst.msk [vmem:[%s7 + $0x8] sm:$0xff] %vm642, %v693
  $region37: #{tpu_custom_call.1} parent=0 // pred_fallthru
    _
  // Predicated region
  $region38: #{tpu_custom_call.1} parent=0 // pred_check
    _
  $region39: #{tpu_custom_call.1} parent=0 // pred_check_branch
    %697 = sbr.rel (0) target = $region41
  $region40: #{tpu_custom_call.1} parent=0 // pred_region
    _
  $region41: #{tpu_custom_call.1} parent=0 // pred_fallthru
    _
  // Predicated region
  $region42: #{tpu_custom_call.1} parent=0 // pred_check
    _
  $region43: #{tpu_custom_call.1} parent=0 // pred_check_branch
    %699 = sbr.rel (0) target = $region45
  $region44: #{tpu_custom_call.1} parent=0 // pred_region
    _
  $region45: #{tpu_custom_call.1} parent=0 // pred_fallthru
    _

</llo_original>
